<compile_context>
chip_gen: v7x
topology: tpu7x:2x2x1
jax: 0.10.0
libtpu: 0.0.40
codegen_flags: <defaults>
</compile_context>

<pallas_src>
import functools

import jax
import jax.numpy as jnp
from jax.experimental import pallas as pl
from jax.experimental.pallas import tpu as pltpu


# Target combined (input + output) bytes per block: 8 MiB in + 8 MiB out for
# f32 -> f32.  Double-buffered footprint = 2x = 32 MiB; +25% slack => ~40 MiB
# VMEM budget (fits v7x's 64 MiB per-TC VMEM, plenty of room on v5e/v6e).
_TARGET_COMBINED_BLOCK_BYTES = 16 * 1024 * 1024
_LANE_CANDIDATES = (8192, 4096, 2048, 1024, 512, 256, 128)
_MIN_VMEM_LIMIT = 4 * 1024 * 1024
# Ragged (n % 128 != 0) arrays up to this many combined bytes are handled as a
# single full-extent block (no padding, never feeds garbage to func).
_SMALL_RAGGED_COMBINED_BYTES = 12 * 1024 * 1024


def _lambda_kernel(x_ref, o_ref, *, func, opt):
    # Elementwise hot path: load the tile, apply the wrapped function, store.
    o_ref[...] = func(x_ref[...], **opt).astype(o_ref.dtype)


def _sublane_min(dtype):
    # 8 sublanes for 32-bit, 16 for 16-bit, 32 for 8-bit (packed vreg tiles).
    itemsize = jnp.dtype(dtype).itemsize
    return max(8, 32 // max(itemsize, 1))


def _pick_lanes(n, sub_min):
    """Widest lane count (multiple of 128) dividing n, preferring full sublanes."""
    lanes = None
    for cand in _LANE_CANDIDATES:
        if n % cand == 0:
            if lanes is None:
                lanes = cand                    # widest dividing candidate
            if n // cand >= sub_min:
                lanes = cand                    # widest that also fills sublanes
                break
    return lanes


def _choose_tile_rows(rows, sub_min, lanes, bytes_per_elem):
    """Block row count: ~16 MiB combined, >=2 blocks when possible, prefer an
    exact division of the row count and an even block count."""
    if rows < sub_min:
        return rows                             # single full-extent block
    r_units = rows // sub_min
    target_units = max(
        1, _TARGET_COMBINED_BLOCK_BYTES // (lanes * bytes_per_elem * sub_min))
    units = min(target_units, r_units)
    # Guarantee >= 2 blocks whenever possible so the "parallel" grid axis can
    # use both TensorCores on v7x.
    units = min(units, max(1, (r_units + 1) // 2))
    # Prefer a tile that divides the row count (no masked partial last block),
    # then an even block count (no 2-vs-1 TC imbalance).  Only shrink down to
    # half the byte target.
    best, best_score = units, -1
    for cand in range(units, max(1, units // 2) - 1, -1):
        nblk = -(-r_units // cand)
        divides = (r_units % cand == 0)
        even = (nblk % 2 == 0) or nblk == 1
        score = 2 * int(divides) + int(even)
        if score > best_score:
            best, best_score = cand, score
            if score == 3:
                break
    return best * sub_min


def _run_pallas_2d(x2d, func, opt, out_dtype, tile_rows):
    rows, lanes = x2d.shape
    in_b = jnp.dtype(x2d.dtype).itemsize
    out_b = jnp.dtype(out_dtype).itemsize
    n = rows * lanes
    # Double-buffered in + out footprint (+25% slack); input and output dtypes
    # may differ (e.g. bf16 -> f32) so both are accounted for.
    footprint = 2 * tile_rows * lanes * (in_b + out_b)
    vmem_limit = max(_MIN_VMEM_LIMIT, footprint + footprint // 4)
    kernel = functools.partial(_lambda_kernel, func=func, opt=opt)
    return pl.pallas_call(
        kernel,
        out_shape=jax.ShapeDtypeStruct((rows, lanes), out_dtype),
        grid_spec=pltpu.PrefetchScalarGridSpec(
            num_scalar_prefetch=0,
            grid=(pl.cdiv(rows, tile_rows),),
            in_specs=[pl.BlockSpec((tile_rows, lanes), lambda i: (i, 0))],
            out_specs=pl.BlockSpec((tile_rows, lanes), lambda i: (i, 0)),
        ),
        compiler_params=pltpu.CompilerParams(
            dimension_semantics=("parallel",),
            vmem_limit_bytes=vmem_limit,
        ),
        # Advisory: this call is bandwidth-heavy; helps XLA overlap neighbors.
        # (Rough per-element compute estimate; default pipeline depth kept —
        # at these block sizes the kernel is DMA-throughput-bound.)
        cost_estimate=pl.CostEstimate(
            flops=2 * n,
            transcendentals=n,
            bytes_accessed=n * (in_b + out_b),
        ),
    )(x2d)


class LambdaPallas:
    """Pallas equivalent of diffsptk.misc.utils.Lambda.

    `func` must be an elementwise (shape-preserving) jnp-compatible function;
    `opt` are keyword arguments baked into the kernel.  On v7x, funcs using
    more than ~1 transcendental per element may become EUP-bound; prefer
    pl.reciprocal(approx=True)/rsqrt/polynomials inside `func` when acceptable.
    """

    def __init__(self, func, **opt):
        self.func = func
        self.opt = opt

    def __call__(self, x):
        func, opt = self.func, self.opt
        orig_shape = x.shape

        # Output spec comes from tracing func -> faithful to the PyTorch Lambda
        # (including any dtype promotion decided by func itself).
        out_aval = jax.eval_shape(lambda v: func(v, **opt), x)
        # TODO(synk): cross-element but shape-preserving funcs (softmax,
        # cumsum, roll, per-axis normalization) pass this shape-only check yet
        # are NOT supported by the flattened elementwise tiling.
        assert out_aval.shape == orig_shape, (
            "LambdaPallas only supports elementwise (shape-preserving) funcs"
        )
        out_dtype = out_aval.dtype

        n = x.size
        if n == 0:
            return jnp.zeros(orig_shape, out_dtype)

        in_b = jnp.dtype(x.dtype).itemsize
        out_b = jnp.dtype(out_dtype).itemsize
        sub_min = _sublane_min(x.dtype)
        x_flat = jnp.ravel(x)  # contiguous flatten

        if n % 128 == 0:
            # Main path: lane-dense 2-D slab, no padding anywhere.
            lanes = _pick_lanes(n, sub_min)
            rows = n // lanes
            tile_rows = _choose_tile_rows(rows, sub_min, lanes, in_b + out_b)
            out_flat = _run_pallas_2d(
                x_flat.reshape(rows, lanes), func, opt, out_dtype, tile_rows
            ).reshape(-1)
        elif n * (in_b + out_b) <= _SMALL_RAGGED_COMBINED_BYTES:
            # Ragged but small: a single full-extent (1, n) block is legal for
            # any n, needs no padding and never feeds garbage rows to func.
            out_flat = _run_pallas_2d(
                x_flat.reshape(1, n), func, opt, out_dtype, 1
            ).reshape(-1)
        else:
            # Large ragged size: bulk/tail split instead of whole-array
            # pad + trim (each of which is a full extra HBM pass).
            bulk_n = (n // 128) * 128
            lanes = _pick_lanes(bulk_n, sub_min)
            rows = bulk_n // lanes
            tile_rows = _choose_tile_rows(rows, sub_min, lanes, in_b + out_b)
            bulk_out = _run_pallas_2d(
                x_flat[:bulk_n].reshape(rows, lanes), func, opt, out_dtype,
                tile_rows,
            ).reshape(-1)
            # <128-element tail: plain JAX (identical semantics, negligible).
            tail_out = func(x_flat[bulk_n:], **opt).astype(out_dtype)
            out_flat = jnp.concatenate([bulk_out, tail_out])

        return out_flat.reshape(orig_shape)


if __name__ == "__main__":
    # Concrete instantiation of the Lambda module (deterministic opts).
    scale = 2.0
    bias = 0.5
    func = lambda x, scale, bias: scale * jnp.tanh(x) + bias

    module = LambdaPallas(func, scale=scale, bias=bias)

    key = jax.random.PRNGKey(0)
    x = jax.random.normal(key, (2, 4, 16, 16), dtype=jnp.float32)  # NCHW

    y = jax.block_until_ready(module(x))

    # Reference check (plain JAX, same semantics as the PyTorch Lambda).
    y_ref = scale * jnp.tanh(x) + bias
    assert y.shape == x.shape and y.dtype == y_ref.dtype
    assert jnp.allclose(y, y_ref, atol=1e-6, rtol=1e-6)

    # Ragged-size path (n % 128 != 0): single full-extent block, no padding.
    x2 = jax.random.normal(jax.random.PRNGKey(0), (3, 5, 7), dtype=jnp.float32)
    y2 = jax.block_until_ready(module(x2))
    assert jnp.allclose(y2, scale * jnp.tanh(x2) + bias, atol=1e-6, rtol=1e-6)

    print("KERNEL_OK")
</pallas_src>

<mosaic_0001>
module attributes {stable_mosaic.version = 11 : i64} {
  func.func @_lambda_kernel(%arg0: i32, %arg1: memref<8x256xf32, #tpu.memory_space<vmem>>, %arg2: memref<8x256xf32, #tpu.memory_space<vmem>>) attributes {dimension_semantics = [#tpu.dimension_semantics<parallel>], iteration_bounds = array<i64: 1>, scalar_prefetch = 0 : i64, scratch_operands = 0 : i64, tpu.core_type = #tpu.core_type<tc>, window_params = [{transform_indices = @transform_0, window_bounds = array<i64: 8, 256>}, {transform_indices = @transform_1, window_bounds = array<i64: 8, 256>}]} {
    %c0 = arith.constant 0 : index
    %c0_0 = arith.constant 0 : index
    %0 = vector.load %arg1[%c0, %c0_0] : memref<8x256xf32, #tpu.memory_space<vmem>>, vector<8x256xf32>
    %1 = math.tanh %0 : vector<8x256xf32>
    %cst = arith.constant 2.000000e+00 : f32
    %2 = vector.broadcast %cst : f32 to vector<8x256xf32>
    %3 = arith.mulf %2, %1 : vector<8x256xf32>
    %cst_1 = arith.constant 5.000000e-01 : f32
    %4 = vector.broadcast %cst_1 : f32 to vector<8x256xf32>
    %5 = arith.addf %3, %4 : vector<8x256xf32>
    %c0_2 = arith.constant 0 : index
    %c0_3 = arith.constant 0 : index
    %6 = vector.load %arg2[%c0_2, %c0_3] : memref<8x256xf32, #tpu.memory_space<vmem>>, vector<8x256xf32>
    tpu.vector_store %arg2[%c0_2, %c0_3], %5 {strides = array<i32>} : memref<8x256xf32, #tpu.memory_space<vmem>>, vector<8x256xf32>,
    return
  }
  func.func @transform_0(%arg0: i32) -> (i32, i32) {
    %c0_i32 = arith.constant 0 : i32
    %c0_i32_0 = arith.constant 0 : i32
    return %arg0, %c0_i32 : i32, i32
  }
  func.func @transform_1(%arg0: i32) -> (i32, i32) {
    %c0_i32 = arith.constant 0 : i32
    %c0_i32_0 = arith.constant 0 : i32
    return %arg0, %c0_i32 : i32, i32
  }
}

</mosaic_0001>

<llo_original>
// kernel: tpu_custom_call.1
$region0: #{tpu_custom_call.1}
  #allocation0 [shape = 'u32[]', space=smem, size = 0x4, offset = 0x4, fixed_abs, tag = 'smem constant byte address 0x4 - core index']
  #allocation1 [shape = 'u32[144,128]{1,0:T(1,128)}', space=vmem, size = 0x12000, scoped, tag = 'internal scratch']
  %s0 = inlined_call_operand.hbm [shape: f32[8,256], index: 0, kind: input, shape index: {}]
  %s1 = inlined_call_operand.hbm [shape: f32[8,256], index: 1, kind: output, shape index: {}]
  %s2 = sld [smem:[#allocation0]]
  $region18: #{tpu_custom_call.1} parent=0
    _
  %s4 = ssub.s32 1, %s2
  %s5 = scalar_select 0, %s4, %s2
  $region1: #{tpu_custom_call.1} parent=0
    #allocation2 [shape = 'u8[8192]{0}', space=vmem, size = 0x2000, scoped, tag = 'input window, operand 0, single buffered']
    #allocation3 [shape = 's32[1]{0}', space=sflag, size = 0x4, scoped, tag = 'scoped memory for tpu_custom_call.1']
    #allocation4 [shape = 's32[1]{0}', space=sflag, size = 0x4, scoped, tag = 'scoped memory for tpu_custom_call.1']
    #allocation5 [shape = 'u8[8192]{0}', space=vmem, size = 0x2000, scoped, tag = 'output window, operand 0, single buffered']
    %6 = vsyncpa [#allocation3], 0
    %7 = vsyncpa [#allocation4], 0
    // Predicated region
    $region2: #{tpu_custom_call.1} parent=1 // pred_check
      _
    $region3: #{tpu_custom_call.1} parent=1 // pred_check_branch
      %9 = sbr.rel (0) target = $region5
    $region4: #{tpu_custom_call.1} parent=1 // pred_region
      %s11 = ssub.s32 256, 256
      %12 = vsyncadd [#allocation3], %s11
      %s14 = sshll.u32 [#allocation2], 4
      %s15 = int_to_ptr.vmem [resolvable:$true] %s14
      %17 = dma.hbm_to_vmem [thread:$0]  %s0, 256, %s15, [#allocation3]
    $region5: #{tpu_custom_call.1} parent=1 // pred_fallthru
      _
    // Predicated region
    $region6: #{tpu_custom_call.1} parent=1 // pred_check
      _
    $region7: #{tpu_custom_call.1} parent=1 // pred_check_branch
      %19 = sbr.rel (0) target = $region9
    $region8: #{tpu_custom_call.1} parent=1 // pred_region
      %20 = dma.done [#allocation3], 256
    $region9: #{tpu_custom_call.1} parent=1 // pred_fallthru
      _
    %v21 = vld [vmem:[#allocation2] sm:$0xff]
    %v22 = vld [vmem:[#allocation2 + $0x8] sm:$0xff]
    %v23 = vtanh.pop %v21
    %v24 = vtanh.pop %v22
    %v25 = vmul.f32 %v23, 2.0
    %v26 = vmul.f32 %v24, 2.0
    %v27 = vadd.f32 %v25, 0.5
    %v28 = vadd.f32 %v26, 0.5
    %29 = vst [vmem:[#allocation5] sm:$0xff] %v27
    %30 = vst [vmem:[#allocation5 + $0x8] sm:$0xff] %v28
    // Predicated region
    $region10: #{tpu_custom_call.1} parent=1 // pred_check
      _
    $region11: #{tpu_custom_call.1} parent=1 // pred_check_branch
      %32 = sbr.rel (0) target = $region13
    $region12: #{tpu_custom_call.1} parent=1 // pred_region
      %s34 = ssub.s32 256, 256
      %35 = vsyncadd [#allocation4], %s34
      %s37 = sshll.u32 [#allocation5], 4
      %s38 = int_to_ptr.vmem [resolvable:$true] %s37
      %40 = dma.vmem_to_hbm [thread:$0]  %s38, 256, %s1, [#allocation4]
    $region13: #{tpu_custom_call.1} parent=1 // pred_fallthru
      _
    // Predicated region
    $region14: #{tpu_custom_call.1} parent=1 // pred_check
      _
    $region15: #{tpu_custom_call.1} parent=1 // pred_check_branch
      %42 = sbr.rel (0) target = $region17
    $region16: #{tpu_custom_call.1} parent=1 // pred_region
      %43 = dma.done [#allocation4], 256
    $region17: #{tpu_custom_call.1} parent=1 // pred_fallthru
      _
    %44 = vsyncpa [#allocation3], 1
    %45 = vsyncpa [#allocation4], 1

</llo_original>
